<compile_context>
chip_gen: v5e
topology: v5e:2x2
jax: 0.10.0
libtpu: 0.0.40
codegen_flags: <defaults>
</compile_context>

<pallas_src>
import numpy as np
import jax
import jax.numpy as jnp
from jax.experimental import pallas as pl
from jax.experimental.pallas import tpu as pltpu


# ---------------------------------------------------------------------------
# Static permutation equivalent to _reshape_x_offset + stride-ks patch extraction.
# perm[tap, row] = flat sample id (in (i, j, k, n) row-major order) that the conv
# multiplies with weight[:, :, a, b, e] (tap = (a*ks + b)*ks + e) at output position
# row = (i*w_o + j)*d_o + k.
# ---------------------------------------------------------------------------
def _reshape_permutation(h_o, w_o, d_o, ks):
    n = ks ** 3
    ids = np.arange(h_o * w_o * d_o * n).reshape(h_o, w_o, d_o, n)
    step1 = np.concatenate(
        [ids[..., s:s + ks * ks].reshape(h_o, w_o, d_o * ks * ks)
         for s in range(0, n, ks * ks)], axis=-1)
    n2 = step1.shape[-1]
    step2 = np.concatenate(
        [step1[..., s:s + d_o * ks * ks].reshape(h_o, w_o * ks, d_o * ks)
         for s in range(0, n2, d_o * ks * ks)], axis=-1)
    r = step2.reshape(h_o, ks, w_o, ks, d_o, ks)
    return np.transpose(r, (1, 3, 5, 0, 2, 4)).reshape(n, h_o * w_o * d_o)


# ---------------------------------------------------------------------------
# Exact replication of torch.grid_sample(align_corners=False, padding_mode='border')
# index math, including the original module's axis-swapped normalization quirk
# (px normalized by hp-1 indexes the dp axis, pz normalized by dp-1 indexes hp).
# Corner k ordering: k = dz*4 + dy*2 + dx.
# ---------------------------------------------------------------------------
def _corners_and_fracs(px, py, pz, hp, wp, dp):
    cx = px * dp / (hp - 1) - 0.5      # indexes axis of size dp (last)
    cy = py * wp / (wp - 1) - 0.5      # indexes axis of size wp
    cz = pz * hp / (dp - 1) - 0.5      # indexes axis of size hp (first)
    cx = jnp.clip(cx, 0.0, dp - 1.0)
    cy = jnp.clip(cy, 0.0, wp - 1.0)
    cz = jnp.clip(cz, 0.0, hp - 1.0)
    x0 = jnp.floor(cx)
    y0 = jnp.floor(cy)
    z0 = jnp.floor(cz)
    fx, fy, fz = cx - x0, cy - y0, cz - z0
    x0i = x0.astype(jnp.int32)
    y0i = y0.astype(jnp.int32)
    z0i = z0.astype(jnp.int32)
    x1i = jnp.minimum(x0i + 1, dp - 1)
    y1i = jnp.minimum(y0i + 1, wp - 1)
    z1i = jnp.minimum(z0i + 1, hp - 1)
    corners = []
    for k in range(8):
        zi = z1i if (k >> 2) & 1 else z0i
        yi = y1i if (k >> 1) & 1 else y0i
        xi = x1i if k & 1 else x0i
        corners.append(zi * (wp * dp) + yi * dp + xi)
    idx = jnp.stack(corners, axis=1)            # (b, 8, ...)
    return idx, fz, fy, fx


# ---------------------------------------------------------------------------
# Pallas kernel: the full strided Conv3d as a single MXU dot per (batch, M-tile).
#   xt_ref: (C*KT, TM) bf16   combined trilinear samples, already im2col-permuted
#   w_ref:  (OUTC, C*KT) bf16 flattened conv weight
#   out_ref:(OUTC, TM)  f32
# ---------------------------------------------------------------------------
def _deform_conv3d_kernel(xt_ref, w_ref, out_ref):
    out_ref[...] = jnp.dot(w_ref[...], xt_ref[...],
                           preferred_element_type=jnp.float32)


# ---------------------------------------------------------------------------
# Full forward pass
# ---------------------------------------------------------------------------
def deform_conv3d_forward(x, offset, weight, kernel_size=3, padding=1, tile_m=None):
    ks = kernel_size
    kt = ks ** 3
    b, c = x.shape[0], x.shape[1]
    outc = weight.shape[0]
    n_k = offset.shape[1] // 3
    h_o, w_o, d_o = offset.shape[2], offset.shape[3], offset.shape[4]
    m_sp = h_o * w_o * d_o
    assert n_k == kt

    if padding != 0:
        x = jnp.pad(x, ((0, 0), (0, 0), (padding,) * 2, (padding,) * 2, (padding,) * 2))
    hp, wp, dp = x.shape[2], x.shape[3], x.shape[4]
    assert hp > 1 and wp > 1 and dp > 1, "degenerate padded spatial size (divide by size-1)"

    # ---- p = p_0 + p_n + offset (natural (i, j, k, n) order) ----
    r = np.arange(-(ks - 1) // 2, (ks - 1) // 2 + 1)
    pnx, pny, pnz = np.meshgrid(r, r, r, indexing="ij")
    pnx = jnp.asarray(pnx.reshape(-1), jnp.float32)[None, :, None, None, None]
    pny = jnp.asarray(pny.reshape(-1), jnp.float32)[None, :, None, None, None]
    pnz = jnp.asarray(pnz.reshape(-1), jnp.float32)[None, :, None, None, None]
    i0 = jnp.arange(h_o, dtype=jnp.float32)[None, None, :, None, None]
    j0 = jnp.arange(w_o, dtype=jnp.float32)[None, None, None, :, None]
    k0 = jnp.arange(d_o, dtype=jnp.float32)[None, None, None, None, :]

    px = i0 + pnx + offset[:, 0:n_k].astype(jnp.float32)
    py = j0 + pny + offset[:, n_k:2 * n_k].astype(jnp.float32)
    pz = k0 + pnz + offset[:, 2 * n_k:3 * n_k].astype(jnp.float32)
    p_all = jnp.stack([px, py, pz], axis=1)                       # (b, 3, N, h, w, d)
    p_all = jnp.transpose(p_all, (0, 1, 3, 4, 5, 2)).reshape(b, 3, m_sp * kt)

    # ---- fold _reshape_x_offset + im2col into a static permutation of the samples ----
    perm = _reshape_permutation(h_o, w_o, d_o, ks)                # (kt, m_sp), static
    perm_idx = jnp.asarray(perm.reshape(-1), jnp.int32)
    p_all = jnp.take(p_all, perm_idx, axis=2).reshape(b, 3, kt, m_sp)

    idx, fz, fy, fx = _corners_and_fracs(
        p_all[:, 0], p_all[:, 1], p_all[:, 2], hp, wp, dp)        # idx: (b, 8, kt, m_sp)

    # ---- 8-corner gather + trilinear combine on the XLA side, in f32 ----
    # TODO(synk): the data-dependent corner gather has no clean Pallas TPU equivalent;
    # it stays as XLA gathers fused with the f32 combine. Only the combined (C*KT, M)
    # bf16 samples reach HBM for the Pallas conv kernel (~8x less kernel read).
    x_flat = x.reshape(b, c, hp * wp * dp).astype(jnp.float32)
    gather = jax.vmap(lambda xf, ix: xf[:, ix])                   # (c,S),(kt,m) -> (c,kt,m)
    wz = (1.0 - fz, fz)
    wy = (1.0 - fy, fy)
    wx = (1.0 - fx, fx)
    xt = jnp.zeros((b, c, kt, m_sp), jnp.float32)
    for k in range(8):                                            # corner-outer accumulate
        wk = wz[(k >> 2) & 1] * wy[(k >> 1) & 1] * wx[k & 1]      # (b, kt, m_sp)
        xt = xt + gather(x_flat, idx[:, k]) * wk[:, None]
    ckt = c * kt
    xt = xt.reshape(b, ckt, m_sp).astype(jnp.bfloat16)            # bf16 MXU operand

    # ---- conv weight pre-flattened: (outc, c*kt) bf16 (matches xt's (c, kt) order) ----
    w_flat = weight.reshape(outc, ckt).astype(jnp.bfloat16)

    # ---- tile the sample axis; account for in+out double buffers (weight block is tiny) ----
    if tile_m is None:
        per_lane = 2 * (ckt * 2) + 2 * (outc * 4)   # dbl-buffered xt (bf16) + out (f32) bytes
        budget = 24 << 20
        tile_m = max(512, min(8192, (budget // per_lane) // 128 * 128))
    tm = m_sp if m_sp <= tile_m else tile_m
    n_mt = pl.cdiv(m_sp, tm)

    out = pl.pallas_call(
        _deform_conv3d_kernel,
        out_shape=jax.ShapeDtypeStruct((b, outc, m_sp), jnp.float32),
        grid=(b, n_mt),
        in_specs=[
            pl.BlockSpec((None, ckt, tm), lambda bi, mi: (bi, 0, mi)),
            pl.BlockSpec((outc, ckt), lambda bi, mi: (0, 0)),
        ],
        out_specs=pl.BlockSpec((None, outc, tm), lambda bi, mi: (bi, 0, mi)),
        compiler_params=pltpu.CompilerParams(
            dimension_semantics=("parallel", "parallel"),
            vmem_limit_bytes=48 * 1024 * 1024),   # <= v7x 64 MiB physical w/ headroom
    )(xt, w_flat)

    # rows are already in (h_o, w_o, d_o) order: no output transpose / slice needed.
    return out.reshape(b, outc, h_o, w_o, d_o)


# ---------------------------------------------------------------------------
# Pure-jnp f32 reference that follows the original PyTorch code path literally
# (grid_sample replication, _reshape_x_offset concat/view chain, im2col conv).
# Used only for the correctness check in __main__.
# ---------------------------------------------------------------------------
def deform_conv3d_reference(x, offset, weight, kernel_size=3, padding=1):
    ks = kernel_size
    kt = ks ** 3
    b, c = x.shape[0], x.shape[1]
    outc = weight.shape[0]
    n_k = offset.shape[1] // 3
    h_o, w_o, d_o = offset.shape[2], offset.shape[3], offset.shape[4]

    if padding != 0:
        x = jnp.pad(x, ((0, 0), (0, 0), (padding,) * 2, (padding,) * 2, (padding,) * 2))
    hp, wp, dp = x.shape[2], x.shape[3], x.shape[4]

    r = np.arange(-(ks - 1) // 2, (ks - 1) // 2 + 1)
    pnx, pny, pnz = np.meshgrid(r, r, r, indexing="ij")
    pnx = jnp.asarray(pnx.reshape(-1), jnp.float32)[None, :, None, None, None]
    pny = jnp.asarray(pny.reshape(-1), jnp.float32)[None, :, None, None, None]
    pnz = jnp.asarray(pnz.reshape(-1), jnp.float32)[None, :, None, None, None]
    i0 = jnp.arange(h_o, dtype=jnp.float32)[None, None, :, None, None]
    j0 = jnp.arange(w_o, dtype=jnp.float32)[None, None, None, :, None]
    k0 = jnp.arange(d_o, dtype=jnp.float32)[None, None, None, None, :]
    px = i0 + pnx + offset[:, 0:n_k]
    py = j0 + pny + offset[:, n_k:2 * n_k]
    pz = k0 + pnz + offset[:, 2 * n_k:3 * n_k]

    def to_flat(t):
        return jnp.transpose(t, (0, 2, 3, 4, 1)).reshape(b, -1)

    idx, fz, fy, fx = _corners_and_fracs(to_flat(px), to_flat(py), to_flat(pz), hp, wp, dp)
    wgt = []
    for k in range(8):
        wz = fz if (k >> 2) & 1 else 1.0 - fz
        wy = fy if (k >> 1) & 1 else 1.0 - fy
        wx = fx if k & 1 else 1.0 - fx
        wgt.append(wz * wy * wx)
    wgt = jnp.stack(wgt, axis=1)                                   # (b, 8, S)

    x_flat = x.reshape(b, c, hp * wp * dp)
    vals = jax.vmap(lambda xf, ix: xf[:, ix])(x_flat, idx)         # (b, c, 8, S)
    xt = jnp.sum(vals * wgt[:, None], axis=2).reshape(b, c, h_o, w_o, d_o, kt)

    x_off = jnp.concatenate(
        [xt[..., s:s + ks * ks].reshape(b, c, h_o, w_o, d_o * ks * ks)
         for s in range(0, kt, ks * ks)], axis=-1)
    n2 = x_off.shape[4]
    x_off = jnp.concatenate(
        [x_off[..., s:s + d_o * ks * ks].reshape(b, c, h_o, w_o * ks, d_o * ks)
         for s in range(0, n2, d_o * ks * ks)], axis=-1)
    x_off = x_off.reshape(b, c, h_o * ks, w_o * ks, d_o * ks)

    a = x_off.reshape(b, c, h_o, ks, w_o, ks, d_o, ks)
    a = jnp.transpose(a, (0, 2, 4, 6, 1, 3, 5, 7)).reshape(b * h_o * w_o * d_o, c * kt)
    wmat = weight.reshape(outc, c * kt).T
    out = (a @ wmat).reshape(b, h_o, w_o, d_o, outc)
    return jnp.transpose(out, (0, 4, 1, 2, 3))


if __name__ == "__main__":
    key = jax.random.PRNGKey(0)
    k_x, k_off, k_w = jax.random.split(key, 3)

    B, INC, OUTC, KS, PAD = 2, 4, 8, 3, 1
    H = W = D = 6
    N = KS ** 3

    x = jax.random.normal(k_x, (B, INC, H, W, D), dtype=jnp.float32)
    offset = 1.5 * jax.random.normal(k_off, (B, 3 * N, H, W, D), dtype=jnp.float32)
    fan_in = INC * KS ** 3
    weight = jax.random.uniform(
        k_w, (OUTC, INC, KS, KS, KS), dtype=jnp.float32,
        minval=-1.0, maxval=1.0) / np.sqrt(fan_in)

    fwd = jax.jit(lambda a, o, w: deform_conv3d_forward(a, o, w, kernel_size=KS, padding=PAD))
    out = jax.block_until_ready(fwd(x, offset, weight))

    assert out.shape == (B, OUTC, H, W, D), out.shape
    assert bool(jnp.all(jnp.isfinite(out)))

    ref = jax.jit(lambda a, o, w: deform_conv3d_reference(a, o, w, kernel_size=KS, padding=PAD)
                  )(x, offset, weight)
    np.testing.assert_allclose(np.asarray(out), np.asarray(ref), rtol=3e-2, atol=3e-2)
    print("KERNEL_OK")
</pallas_src>

<mosaic_0001>
module attributes {stable_mosaic.version = 11 : i64} {
  func.func @_deform_conv3d_kernel(%arg0: i32, %arg1: i32, %arg2: memref<1x108x216xbf16, #tpu.memory_space<vmem>>, %arg3: memref<8x108xbf16, #tpu.memory_space<vmem>>, %arg4: memref<1x8x216xf32, #tpu.memory_space<vmem>>) attributes {dimension_semantics = [#tpu.dimension_semantics<parallel>, #tpu.dimension_semantics<parallel>], iteration_bounds = array<i64: 2, 1>, scalar_prefetch = 0 : i64, scratch_operands = 0 : i64, tpu.core_type = #tpu.core_type<tc>, window_params = [{transform_indices = @transform_0, window_bounds = array<i64: 1, 108, 216>}, {pipeline_mode = #tpu.pipeline_mode<synchronous>, transform_indices = @transform_1, window_bounds = array<i64: 8, 108>}, {transform_indices = @transform_2, window_bounds = array<i64: 1, 8, 216>}]} {
    %c0 = arith.constant 0 : index
    %c0_0 = arith.constant 0 : index
    %0 = vector.load %arg3[%c0, %c0_0] : memref<8x108xbf16, #tpu.memory_space<vmem>>, vector<8x108xbf16>
    %c0_1 = arith.constant 0 : index
    %c0_2 = arith.constant 0 : index
    %c0_3 = arith.constant 0 : index
    %1 = vector.load %arg2[%c0_1, %c0_2, %c0_3] : memref<1x108x216xbf16, #tpu.memory_space<vmem>>, vector<1x108x216xbf16>
    %2 = vector.shape_cast %1 : vector<1x108x216xbf16> to vector<108x216xbf16>
    %cst = arith.constant dense<0.000000e+00> : vector<8x216xf32>
    %3 = tpu.matmul %0, %2, %cst {dimension_numbers = #tpu.dot_dimension_numbers<[1], [0], [0], [1], [0, 0, 1, 1], [], []>} : vector<8x108xbf16>, vector<108x216xbf16>, vector<8x216xf32> -> vector<8x216xf32>
    %c0_4 = arith.constant 0 : index
    %c0_5 = arith.constant 0 : index
    %c0_6 = arith.constant 0 : index
    %4 = vector.load %arg4[%c0_4, %c0_5, %c0_6] : memref<1x8x216xf32, #tpu.memory_space<vmem>>, vector<1x8x216xf32>
    %5 = vector.shape_cast %4 : vector<1x8x216xf32> to vector<8x216xf32>
    %6 = vector.shape_cast %3 : vector<8x216xf32> to vector<1x8x216xf32>
    tpu.vector_store %arg4[%c0_4, %c0_5, %c0_6], %6 {strides = array<i32>} : memref<1x8x216xf32, #tpu.memory_space<vmem>>, vector<1x8x216xf32>,
    return
  }
  func.func @transform_0(%arg0: i32, %arg1: i32) -> (i32, i32, i32) {
    %c0_i32 = arith.constant 0 : i32
    %c0_i32_0 = arith.constant 0 : i32
    return %arg0, %c0_i32, %arg1 : i32, i32, i32
  }
  func.func @transform_1(%arg0: i32, %arg1: i32) -> (i32, i32) {
    %c0_i32 = arith.constant 0 : i32
    %c0_i32_0 = arith.constant 0 : i32
    %c0_i32_1 = arith.constant 0 : i32
    return %c0_i32, %c0_i32_0 : i32, i32
  }
  func.func @transform_2(%arg0: i32, %arg1: i32) -> (i32, i32, i32) {
    %c0_i32 = arith.constant 0 : i32
    %c0_i32_0 = arith.constant 0 : i32
    return %arg0, %c0_i32, %arg1 : i32, i32, i32
  }
}

</mosaic_0001>

<llo_original>
// kernel: _lambda_.1
$region0: #{_lambda_.1}
  #allocation0 [shape = 'u32[]', space=smem, size = 0x4, offset = 0x4, fixed_abs, tag = 'smem constant byte address 0x4 - core index']
  #allocation1 [shape = 'u32[72,128]{1,0:T(1,128)}', space=vmem, size = 0x9000, scoped, tag = 'internal scratch']
  %s0 = inlined_call_operand.vmem [shape: bf16[2,108,216], index: 0, kind: input, shape index: {}]
  %s1 = inlined_call_operand.vmem [shape: bf16[8,108], index: 1, kind: input, shape index: {}]
  %s2 = inlined_call_operand.vmem [shape: f32[2,8,216], index: 2, kind: output, shape index: {}]
  %s3 = sld [smem:[#allocation0]]
  $region41: #{_lambda_.1} parent=0
    _
  %s5 = ssub.s32 1, %s3
  %s6 = scalar_select 0, %s5, %s3
  loop: start=0, step=1, limit=4
  $region2: #{_lambda_.1} parent=0 // loop_pre_header
    _
  $region3: #{_lambda_.1} parent=0 // loop_header
    %s8 = sphi 0, %s12
    %p9 = scmp.ge.s32.totalorder %s8, 4
    %s15 = sphi 0, %s27
    %s16 = sphi 0, %s23
    %s17 = sphi 0, %s15
    %s18 = sphi 0, %s16
    %s19 = sphi 0, %s17
    %s20 = sphi 0, %s18
    %s32 = sphi 0, %s34
    %s35 = sphi 0, %s32
    %s36 = sphi 0, %s35
    %s52 = sphi 0, %s36
    %s56 = sphi 0, %s56
    %s58 = sphi 0, %s56
    %s59 = sphi 0, %s58
    %s73 = sphi 0, %s59
    %s81 = sphi 0, %s83
    %s84 = sphi 0, %s81
    %s85 = sphi 0, %s84
    %s101 = sphi 0, %s85
  $region4: #{_lambda_.1} parent=0 // loop_header_branch
    %11 = sbr.rel (%p9) target = $region8
  $region5: #{_lambda_.1} parent=0 // loop_body
    %s13 = ssub.s32 %s8, 1
    %s14 = ssub.s32 %s8, 2
    %s21 = sadd.s32 1, %s16
    %p22 = scmp.ge.s32.totalorder %s21, 1
    %s23 = scalar_select %p22, 0, %s21
    %s24 = sadd.s32 1, %s15
    %s25 = scalar_select %p22, %s24, %s15
    %p26 = scmp.ge.s32.totalorder %s25, 2
    %s27 = scalar_select %p26, 0, %s25
    %s28 = ssub.s32 %s15, %s27
    %s29 = ssub.s32 %s16, %s23
    %s30 = sor.u32 %s28, %s29
    %p31 = scmp.eq.s32.totalorder %s30, 0
    %s33 = sadd.s32 %s32, 1
    %s34 = scalar_select %p31, %s32, %s33
    %p37 = pneg %p31
    %p38 = scmp.eq.s32.totalorder %s8, 1
    %p39 = por %p37, %p38
    %p40 = scmp.ne.s32.totalorder %s32, %s35
    %p41 = scmp.eq.s32.totalorder %s8, 0
    %p42 = por %p40, %p41
    %p43 = scmp.ne.s32.totalorder %s32, %s35
    %p44 = scmp.eq.s32.totalorder %s13, 1
    %p45 = por %p43, %p44
    %p46 = scmp.ne.s32.totalorder %s35, %s36
    %p47 = scmp.eq.s32.totalorder %s13, 0
    %p48 = por %p46, %p47
    %p49 = scmp.ne.s32.totalorder %s35, %s36
    %p50 = scmp.eq.s32.totalorder %s14, 1
    %p51 = por %p49, %p50
    %p53 = scmp.ne.s32.totalorder %s36, %s52
    %p54 = scmp.eq.s32.totalorder %s14, 0
    %p55 = por %p53, %p54
    %s57 = sadd.s32 %s56, 1
    %p60 = scmp.eq.s32.totalorder %s8, 1
    %p61 = scmp.ne.s32.totalorder %s56, %s58
    %p62 = scmp.eq.s32.totalorder %s8, 0
    %p63 = por %p61, %p62
    %p64 = scmp.ne.s32.totalorder %s56, %s58
    %p65 = scmp.eq.s32.totalorder %s13, 1
    %p66 = por %p64, %p65
    %p67 = scmp.ne.s32.totalorder %s58, %s59
    %p68 = scmp.eq.s32.totalorder %s13, 0
    %p69 = por %p67, %p68
    %p70 = scmp.ne.s32.totalorder %s58, %s59
    %p71 = scmp.eq.s32.totalorder %s14, 1
    %p72 = por %p70, %p71
    %p74 = scmp.ne.s32.totalorder %s59, %s73
    %p75 = scmp.eq.s32.totalorder %s14, 0
    %p76 = por %p74, %p75
    %s77 = ssub.s32 %s15, %s27
    %s78 = ssub.s32 %s16, %s23
    %s79 = sor.u32 %s77, %s78
    %p80 = scmp.eq.s32.totalorder %s79, 0
    %s82 = sadd.s32 %s81, 1
    %s83 = scalar_select %p80, %s81, %s82
    %p86 = pneg %p80
    %p87 = scmp.eq.s32.totalorder %s8, 1
    %p88 = por %p86, %p87
    %p89 = scmp.ne.s32.totalorder %s81, %s84
    %p90 = scmp.eq.s32.totalorder %s8, 0
    %p91 = por %p89, %p90
    %p92 = scmp.ne.s32.totalorder %s81, %s84
    %p93 = scmp.eq.s32.totalorder %s13, 1
    %p94 = por %p92, %p93
    %p95 = scmp.ne.s32.totalorder %s84, %s85
    %p96 = scmp.eq.s32.totalorder %s13, 0
    %p97 = por %p95, %p96
    %p98 = scmp.ne.s32.totalorder %s84, %s85
    %p99 = scmp.eq.s32.totalorder %s14, 1
    %p100 = por %p98, %p99
    %p102 = scmp.ne.s32.totalorder %s85, %s101
    %p103 = scmp.eq.s32.totalorder %s14, 0
    %p104 = por %p102, %p103
    %p105 = scmp.le.s32.totalorder 1, %s8
    %p106 = scmp.lt.s32.totalorder %s8, 3
    %p107 = pnand %p105, %p106
    %p108 = pneg %p107
    // Predicated region
    $region9: #{_lambda_.1} parent=5 // pred_check
      _
    $region10: #{_lambda_.1} parent=5 // pred_check_branch
      %110 = sbr.rel (%p107) target = $region12
    $region11: #{_lambda_.1} parent=5 // pred_region
      %s111 = ssub.s32 %s8, 1
      // Predicated region
      $region13: #{_lambda_.1} parent=11 // pred_check
        %p112 = pneg %p69
      $region14: #{_lambda_.1} parent=11 // pred_check_branch
        %114 = sbr.rel (%p112) target = $region16
      $region15: #{_lambda_.1} parent=11 // pred_region
        _
      $region16: #{_lambda_.1} parent=11 // pred_fallthru
        _
    $region12: #{_lambda_.1} parent=5 // pred_fallthru
      _
    %p115 = scmp.lt.s32.totalorder %s8, 2
    // Predicated region
    $region17: #{_lambda_.1} parent=5 // pred_check
      %p116 = pneg %p115
    $region18: #{_lambda_.1} parent=5 // pred_check_branch
      %118 = sbr.rel (%p116) target = $region20
    $region19: #{_lambda_.1} parent=5 // pred_region
      // Predicated region
      $region21: #{_lambda_.1} parent=19 // pred_check
        %p119 = pneg %p42
      $region22: #{_lambda_.1} parent=19 // pred_check_branch
        %121 = sbr.rel (%p119) target = $region24
      $region23: #{_lambda_.1} parent=19 // pred_region
        %s122 = smul.u32 2, %s16
        %p123 = scmp.lt.s32.totalorder %s15, 1
        %s124 = scalar_select %p123, %s15, 1
        %p125 = scmp.lt.s32.totalorder %s122, 1
        %s126 = scalar_select %p125, %s122, 1
        %s127 = smul.addr %s124, 28
        %s128 = sadd.s32 %s126, %s127
        %s129 = smul.addr %s128, 4
        %s130 = scalar_lea.vmem %s0, %s129
        %s131 = smul.u32 2, %s16
      $region24: #{_lambda_.1} parent=19 // pred_fallthru
        _
    $region20: #{_lambda_.1} parent=5 // pred_fallthru
      _
    %p132 = scmp.le.s32.totalorder 1, %s8
    %p133 = scmp.lt.s32.totalorder %s8, 3
    %p134 = pnand %p132, %p133
    %p135 = pneg %p134
    // Predicated region
    $region25: #{_lambda_.1} parent=5 // pred_check
      _
    $region26: #{_lambda_.1} parent=5 // pred_check_branch
      %137 = sbr.rel (%p134) target = $region28
    $region27: #{_lambda_.1} parent=5 // pred_region
      %s138 = ssub.s32 %s8, 1
      %s139 = smul.u32 2, %s18
      %p140 = scmp.lt.s32.totalorder %s17, 1
      %s141 = scalar_select %p140, %s17, 1
      %p142 = scmp.lt.s32.totalorder %s139, 1
      %s143 = scalar_select %p142, %s139, 1
      %s144 = smul.addr %s141, 28
      %s145 = sadd.s32 %s143, %s144
      %s146 = smul.addr %s145, 4
      %s147 = scalar_lea.vmem %s0, %s146
      %p148 = pneg %p48
      %p149 = pneg %p45
      %p150 = pneg %p69
      %p151 = pneg %p66
      %p152 = pneg %p97
      %p153 = pneg %p94
      %s154 = smul.u32 2, %s18
      %p155 = scmp.lt.s32.totalorder %s17, 1
      %s156 = scalar_select %p155, %s17, 1
      %p157 = scmp.lt.s32.totalorder %s154, 1
      %s158 = scalar_select %p157, %s154, 1
      %s159 = smul.addr %s156, 2
      %s160 = sadd.s32 %s158, %s159
      %s161 = smul.addr %s160, 8
      %s162 = scalar_lea.vmem %s2, %s161
      %s163 = smul.u32 2, %s18
      %p164 = scmp.lt.s32.totalorder %s17, 1
      %s165 = scalar_select %p164, %s17, 1
      %p166 = scmp.lt.s32.totalorder %s163, 1
      %s167 = scalar_select %p166, %s163, 1
      %s168 = smul.addr %s165, 28
      %s169 = sadd.s32 %s167, %s168
      %s170 = smul.addr %s169, 4
      %s171 = scalar_lea.vmem %s0, %s170
      %s172 = smul.u32 2, %s18
      %s173 = smul.u32 2, %s18
      %p174 = scmp.lt.s32.totalorder %s17, 1
      %s175 = scalar_select %p174, %s17, 1
      %p176 = scmp.lt.s32.totalorder %s173, 1
      %s177 = scalar_select %p176, %s173, 1
      %s178 = smul.addr %s175, 2
      %s179 = sadd.s32 %s177, %s178
      %s180 = smul.addr %s179, 8
      %s181 = scalar_lea.vmem %s2, %s180
      %s182 = smul.u32 2, %s18
      %v184 = vld [vmem:[%s1] sm:$0xf]
      %v185 = vld [vmem:[%s171] sm:$0xff]
      %v186 = vld [vmem:[%s171 + $0x8] sm:$0xff]
      %v187 = vld [vmem:[%s171 + $0x10] sm:$0xff]
      %v188 = vld [vmem:[%s171 + $0x18] sm:$0xff]
      %v189 = vld [vmem:[%s171 + $0x20] sm:$0xff]
      %v190 = vld [vmem:[%s171 + $0x28] sm:$0xff]
      %v191 = vld [vmem:[%s171 + $0x30] sm:$0xff]
      %v192 = vld [vmem:[%s171 + $0x38] sm:$0xff]
      %v193 = vld [vmem:[%s171 + $0x40] sm:$0xff]
      %v194 = vld [vmem:[%s171 + $0x48] sm:$0xff]
      %v195 = vld [vmem:[%s171 + $0x50] sm:$0xff]
      %v196 = vld [vmem:[%s171 + $0x58] sm:$0xff]
      %v197 = vld [vmem:[%s171 + $0x60] sm:$0xff]
      %v198 = vld [vmem:[%s171 + $0x68] sm:$0x33]
      %v213 = vunpack.c.l.b16 %v185
      %v214 = vunpack.c.h.b16 %v185
      %v215 = vunpack.c.l.b16 %v186
      %v216 = vunpack.c.h.b16 %v186
      %v217 = vunpack.c.l.b16 %v187
      %v218 = vunpack.c.h.b16 %v187
      %v219 = vunpack.c.l.b16 %v188
      %v220 = vunpack.c.h.b16 %v188
      %v221 = vunpack.c.l.b16 %v189
      %v222 = vunpack.c.h.b16 %v189
      %v223 = vunpack.c.l.b16 %v190
      %v224 = vunpack.c.h.b16 %v190
      %v225 = vunpack.c.l.b16 %v191
      %v226 = vunpack.c.h.b16 %v191
      %v227 = vunpack.c.l.b16 %v192
      %v228 = vunpack.c.h.b16 %v192
      %v229 = vunpack.c.l.b16 %v193
      %v230 = vunpack.c.h.b16 %v193
      %v231 = vunpack.c.l.b16 %v194
      %v232 = vunpack.c.h.b16 %v194
      %v233 = vunpack.c.l.b16 %v195
      %v234 = vunpack.c.h.b16 %v195
      %v235 = vunpack.c.l.b16 %v196
      %v236 = vunpack.c.h.b16 %v196
      %v237 = vunpack.c.l.b16 %v197
      %v238 = vunpack.c.h.b16 %v197
      %v239 = vunpack.c.l.b16 %v198
      %v240 = vunpack.c.h.b16 %v198
      %v241 = vpack.c.b16 %v215, %v213
      %v242 = vpack.c.b16 %v216, %v214
      %v243 = vpack.c.b16 %v219, %v217
      %v244 = vpack.c.b16 %v220, %v218
      %v245 = vpack.c.b16 %v223, %v221
      %v246 = vpack.c.b16 %v224, %v222
      %v247 = vpack.c.b16 %v227, %v225
      %v248 = vpack.c.b16 %v228, %v226
      %v249 = vpack.c.b16 %v231, %v229
      %v250 = vpack.c.b16 %v232, %v230
      %v251 = vpack.c.b16 %v235, %v233
      %v252 = vpack.c.b16 %v236, %v234
      %v253 = vpack.c.b16 %v239, %v237
      %v254 = vpack.c.b16 %v240, %v238
      %vm267 = vcmask 883712
      %v269 = vsel %vm267, %v184, 0
      %vm271 = vcmask 1045504
      %v273 = vsel %vm271, %v253, 0
      %v276 = vsel %vm271, %v254, 0
      %278 = vmatpush.bf16.msra.mxu0 0
      %279 = vmatpush.bf16.msra.mxu0 %v273
      %280 = vmatpush.bf16.msra.mxu0 %v251
      %281 = vmatpush.bf16.msra.mxu0 %v249
      %282 = vmatpush.bf16.msra.mxu0 %v247
      %283 = vmatpush.bf16.msra.mxu0 %v245
      %284 = vmatpush.bf16.msra.mxu0 %v243
      %285 = vmatpush.bf16.msra.mxu0 %v241
      %286 = vmatmul.bf16.gmra.mxu0 %v269
      %v287 = vpop.f32.mrf.mxu0
      %v288 = vadd.f32 0.0, %v287
      %v289 = vpop.f32.mrf.mxu0
      %290 = vdwg.mxu0
      %291 = vmatpush.bf16.msra.mxu0 0
      %292 = vmatpush.bf16.msra.mxu0 %v276
      %293 = vmatpush.bf16.msra.mxu0 %v252
      %294 = vmatpush.bf16.msra.mxu0 %v250
      %295 = vmatpush.bf16.msra.mxu0 %v248
      %296 = vmatpush.bf16.msra.mxu0 %v246
      %297 = vmatpush.bf16.msra.mxu0 %v244
      %298 = vmatpush.bf16.msra.mxu0 %v242
      %299 = vmatmul.bf16.gmra.mxu0 %v269
      %v300 = vpop.f32.mrf.mxu0
      %v301 = vadd.f32 0.0, %v300
      %v302 = vpop.f32.mrf.mxu0
      %303 = vdwg.mxu0
      %304 = vst [vmem:[%s181] sm:$0xff] %v288
      %vm305 = vcmask 719872
      %306 = vst.msk [vmem:[%s181 + $0x8] sm:$0xff] %vm305, %v301
      %s307 = smul.u32 2, %s18
      %p308 = scmp.lt.s32.totalorder %s17, 1
      %s309 = scalar_select %p308, %s17, 1
      %p310 = scmp.lt.s32.totalorder %s307, 1
      %s311 = scalar_select %p310, %s307, 1
      %s312 = smul.addr %s309, 2
      %s313 = sadd.s32 %s311, %s312
      %s314 = smul.addr %s313, 8
      %s315 = scalar_lea.vmem %s2, %s314
      // Predicated region
      $region29: #{_lambda_.1} parent=27 // pred_check
        %p316 = pneg %p94
      $region30: #{_lambda_.1} parent=27 // pred_check_branch
        %318 = sbr.rel (%p316) target = $region32
      $region31: #{_lambda_.1} parent=27 // pred_region
        %s319 = smul.u32 2, %s18
      $region32: #{_lambda_.1} parent=27 // pred_fallthru
        _
    $region28: #{_lambda_.1} parent=5 // pred_fallthru
      _
    %p320 = scmp.le.s32.totalorder 2, %s8
    // Predicated region
    $region33: #{_lambda_.1} parent=5 // pred_check
      %p321 = pneg %p320
    $region34: #{_lambda_.1} parent=5 // pred_check_branch
      %323 = sbr.rel (%p321) target = $region36
    $region35: #{_lambda_.1} parent=5 // pred_region
      %s324 = ssub.s32 %s8, 2
      // Predicated region
      $region37: #{_lambda_.1} parent=35 // pred_check
        %p325 = pneg %p100
      $region38: #{_lambda_.1} parent=35 // pred_check_branch
        %327 = sbr.rel (%p325) target = $region40
      $region39: #{_lambda_.1} parent=35 // pred_region
        %s328 = smul.u32 2, %s20
        %p329 = scmp.lt.s32.totalorder %s19, 1
        %s330 = scalar_select %p329, %s19, 1
        %p331 = scmp.lt.s32.totalorder %s328, 1
        %s332 = scalar_select %p331, %s328, 1
        %s333 = smul.addr %s330, 2
        %s334 = sadd.s32 %s332, %s333
        %s335 = smul.addr %s334, 8
        %s336 = scalar_lea.vmem %s2, %s335
      $region40: #{_lambda_.1} parent=35 // pred_fallthru
        _
    $region36: #{_lambda_.1} parent=5 // pred_fallthru
      _
  $region6: #{_lambda_.1} parent=0 // loop_footer
    %s12 = sadd.s32 1, %s8
  $region7: #{_lambda_.1} parent=0 // loop_footer_branch
    %7 = sbr.rel target = $region3
  $region8: #{_lambda_.1} parent=0 // loop_exit
    _

</llo_original>
